<compile_context>
chip_gen: v6e
topology: v6e:2x2x1
jax: 0.10.0
libtpu: 0.0.40
codegen_flags: <defaults>
</compile_context>

<pallas_src>
import jax
import jax.numpy as jnp
from jax import lax
from jax.experimental import pallas as pl
from jax.experimental.pallas import tpu as pltpu


def _round_up(v, m):
    return (v + m - 1) // m * m


# --------------------------------------------------------------------------
# Kernel 1: per-edge messages  m = ELU(We @ ea + be) * x[tgt] * mask   [Cin, E]
# --------------------------------------------------------------------------
def message_kernel(ea_ref, xg_ref, we_ref, be_ref, m_ref):
    ea = ea_ref[...]                                             # [72, TE] f32

    # edge linear (K padded 65 -> 72) + bias, then ELU(alpha=1).
    edge = jnp.dot(we_ref[...], ea, preferred_element_type=jnp.float32) + be_ref[...]
    # ELU negative branch; min() guards exp overflow on the (discarded) positive
    # side.  (expm1 would be marginally more accurate near 0.)
    edge = jnp.where(edge > 0.0, edge, jnp.exp(jnp.minimum(edge, 0.0)) - 1.0)

    # mask = edge_attr[:, 0] < 8 (row 0 of the transposed tile; padded edge
    # columns carry a 1e9 sentinel in row 0 so the mask zeroes them).
    mask = (ea[0:1, :] < 8.0).astype(jnp.float32)                # [1, TE]

    # message; stored bf16 (exact 0 for padded rows/cols) to halve the HBM
    # stream feeding the scatter kernel.  Elementwise math stays f32 (v5e VPU).
    m_ref[...] = (edge * xg_ref[...] * mask).astype(m_ref.dtype)  # [Cin_p, TE]


# --------------------------------------------------------------------------
# Kernel 2: scatter-sum by (sorted) edge sources + update linear
# --------------------------------------------------------------------------
def scatter_update_kernel(tid_ref, cnt_ref, m_ref, src_ref, x_ref, wu_ref, bu_ref,
                          out_ref, acc_ref):
    i = pl.program_id(0)          # node block
    j = pl.program_id(1)          # edge-tile slot for this node block

    @pl.when(j == 0)
    def _init():
        acc_ref[...] = jnp.zeros_like(acc_ref)

    # Only the first cnt[i]+1 slots carry edge tiles whose (sorted) sources can
    # land in this node block; later slots revisit the same tile (no new DMA)
    # and skip compute entirely.
    @pl.when(j <= cnt_ref[i])
    def _accumulate():
        tn = acc_ref.shape[1]
        # node-id column [TN, 1] broadcast against the [1, TE] source row.
        node_ids = i * tn + lax.broadcasted_iota(jnp.int32, (tn, 1), 0)
        onehot = (node_ids == src_ref[...]).astype(jnp.bfloat16)     # [TN, TE]
        # acc[c, n] += sum_e m[c, e] * onehot[n, e]   (bf16 MXU, f32 accumulate)
        acc_ref[...] += lax.dot_general(m_ref[...], onehot,
                                        (((1,), (1,)), ((), ())),
                                        preferred_element_type=jnp.float32)

    @pl.when(j == pl.num_programs(1) - 1)
    def _finalize():
        h = x_ref[...] + acc_ref[...]                                 # [Cin_p, TN]
        out = jnp.dot(wu_ref[...], h, preferred_element_type=jnp.float32) + bu_ref[...]
        out_ref[...] = out.astype(out_ref.dtype)                      # [Cout_p, TN]


# --------------------------------------------------------------------------
# Wrapper
# --------------------------------------------------------------------------
def simple_graph_conv(x, edge_index, edge_attr, we, be, wu, bu,
                      *, edge_tile=1024, node_tile=512):
    """x: [N, Cin]; edge_index: [2, E] int32; edge_attr: [E, F>=65];
    we: [65, Cin] (= edgelinear.weight^T), be: [Cin];
    wu: [Cin, Cout] (= updatalinear.weight^T), bu: [Cout]."""
    N, cin = x.shape
    E = edge_attr.shape[0]
    cout = wu.shape[1]
    f32 = jnp.float32

    # ---- tiling ------------------------------------------------------------
    K = 72                                            # 65 -> 72 (multiple of 8)
    cin_p = _round_up(cin, 16)                        # bf16-native sublane pack
    cout_p = _round_up(cout, 8)

    n_ceil = _round_up(max(N, 1), 128)
    tn = min(node_tile, n_ceil)
    # Ensure >= 2 node blocks when possible so the "parallel" node axis spans
    # both TensorCores on v7x; per-step VMEM is only a few MiB so don't shrink
    # tiles for VMEM reasons.
    if n_ceil >= 256 and tn >= n_ceil:
        tn = _round_up(n_ceil // 2, 128)
    tn = _round_up(tn, 128)
    n_pad = _round_up(n_ceil, tn)
    n_blocks = n_pad // tn

    e_ceil = _round_up(max(E, 1), 128)
    te = _round_up(min(edge_tile, e_ceil), 128)
    e_pad = _round_up(e_ceil, te)
    e_blocks = e_pad // te

    # ---- host-side prep: sort edges by source, build lane-dense buffers -----
    x_f = x.astype(f32)
    src = edge_index[0].astype(jnp.int32)
    tgt = edge_index[1].astype(jnp.int32)

    order = jnp.argsort(src)
    src_s = src[order]
    tgt_s = tgt[order]
    ea_s = edge_attr[order, :65].astype(f32)                       # [E, 65]

    # [72, E_pad] built directly (no [E_pad, 128] zero-fill + transpose).
    ea_t = jnp.zeros((K, e_pad), f32).at[:65, :E].set(ea_s.T)
    if e_pad > E:
        ea_t = ea_t.at[0, E:].set(1e9)       # sentinel -> (<8) mask kills pads

    x_cT = x_f.T                                                   # [Cin, N]
    # x[tgt] gathered along axis 1 of x^T -> already lane-dense [Cin, E].
    xg_t = jnp.zeros((cin_p, e_pad), f32).at[:cin, :E].set(jnp.take(x_cT, tgt_s, axis=1))

    # lane-dense source row; padded columns get an out-of-range node id.
    src_row = jnp.full((1, e_pad), n_pad, jnp.int32).at[0, :E].set(src_s)

    x_t = jnp.zeros((cin_p, n_pad), f32).at[:cin, :N].set(x_cT)

    we_p = jnp.zeros((cin_p, K), f32).at[:cin, :65].set(we.astype(f32).T)
    be_p = jnp.zeros((cin_p, 1), f32).at[:cin, 0].set(be.astype(f32))
    wu_p = jnp.zeros((cout_p, cin_p), f32).at[:cout, :cin].set(wu.astype(f32).T)
    bu_p = jnp.zeros((cout_p, 1), f32).at[:cout, 0].set(bu.astype(f32))

    # ---- per-node-block edge-tile schedule (sorted sources are contiguous) --
    blk_starts = jnp.arange(n_blocks, dtype=jnp.int32) * tn
    lo = jnp.searchsorted(src_s, blk_starts, side="left").astype(jnp.int32)
    hi = jnp.searchsorted(src_s, blk_starts + tn, side="left").astype(jnp.int32)
    ts = jnp.minimum(lo // te, e_blocks - 1)                       # first tile
    tl = jnp.clip((hi + te - 1) // te - 1, ts, e_blocks - 1)       # last tile
    cnt = (tl - ts).astype(jnp.int32)                              # valid slots-1
    tile_tbl = jnp.minimum(
        ts[:, None] + jnp.arange(e_blocks, dtype=jnp.int32)[None, :],
        tl[:, None]).reshape(-1).astype(jnp.int32)                 # [n_blocks*e_blocks]

    vmem_limit = 32 * 1024 * 1024

    # ---- kernel 1: messages (edge axis only, run once) ----------------------
    cost_msg = pl.CostEstimate(
        flops=2 * cin_p * K * e_pad + 4 * cin_p * e_pad,
        transcendentals=cin_p * e_pad,
        bytes_accessed=4 * (K * e_pad + cin_p * e_pad + cin_p * K + cin_p)
                       + 2 * cin_p * e_pad,
    )
    m_t = pl.pallas_call(
        message_kernel,
        out_shape=jax.ShapeDtypeStruct((cin_p, e_pad), jnp.bfloat16),
        grid=(e_blocks,),
        in_specs=[
            pl.BlockSpec((K, te), lambda j: (0, j)),            # edge_attr^T tile
            pl.BlockSpec((cin_p, te), lambda j: (0, j)),        # x[tgt]^T tile
            pl.BlockSpec((cin_p, K), lambda j: (0, 0)),         # We (resident)
            pl.BlockSpec((cin_p, 1), lambda j: (0, 0)),         # be
        ],
        out_specs=pl.BlockSpec((cin_p, te), lambda j: (0, j)),
        compiler_params=pltpu.CompilerParams(
            dimension_semantics=("parallel",),
            vmem_limit_bytes=vmem_limit,
        ),
        cost_estimate=cost_msg,
    )(ea_t, xg_t, we_p, be_p)

    # ---- kernel 2: scatter-sum + update linear ------------------------------
    visited_tiles = e_blocks + n_blocks            # ~tiles actually computed on
    cost_scatter = pl.CostEstimate(
        flops=2 * cin_p * tn * te * visited_tiles + 2 * cout_p * cin_p * n_pad,
        transcendentals=0,
        bytes_accessed=(2 * cin_p * te + 4 * te) * visited_tiles
                       + 4 * (cin_p * n_pad + cout_p * cin_p + cout_p
                              + cout_p * n_pad),
    )
    out_t = pl.pallas_call(
        scatter_update_kernel,
        out_shape=jax.ShapeDtypeStruct((cout_p, n_pad), f32),
        grid_spec=pltpu.PrefetchScalarGridSpec(
            num_scalar_prefetch=2,
            grid=(n_blocks, e_blocks),
            in_specs=[
                pl.BlockSpec((cin_p, te),
                             lambda i, j, tid_r, cnt_r: (0, tid_r[i * e_blocks + j])),
                pl.BlockSpec((1, te),
                             lambda i, j, tid_r, cnt_r: (0, tid_r[i * e_blocks + j])),
                pl.BlockSpec((cin_p, tn), lambda i, j, tid_r, cnt_r: (0, i)),
                pl.BlockSpec((cout_p, cin_p), lambda i, j, tid_r, cnt_r: (0, 0)),
                pl.BlockSpec((cout_p, 1), lambda i, j, tid_r, cnt_r: (0, 0)),
            ],
            out_specs=pl.BlockSpec((cout_p, tn), lambda i, j, tid_r, cnt_r: (0, i)),
            scratch_shapes=[pltpu.VMEM((cin_p, tn), jnp.float32)],
        ),
        compiler_params=pltpu.CompilerParams(
            dimension_semantics=("parallel", "arbitrary"),
            vmem_limit_bytes=vmem_limit,
        ),
        cost_estimate=cost_scatter,
    )(tile_tbl, cnt, m_t, src_row, x_t, wu_p, bu_p)

    return out_t[:cout, :N].T


# --------------------------------------------------------------------------
# Pure-JAX reference
# --------------------------------------------------------------------------
def reference(x, edge_index, edge_attr, we, be, wu, bu, *, bf16_messages=False):
    src, tgt = edge_index[0], edge_index[1]
    ea = edge_attr[:, :65]
    edge = ea @ we + be
    edge = jnp.where(edge > 0, edge, jnp.exp(jnp.minimum(edge, 0.0)) - 1.0)
    mask = (edge_attr[:, 0:1] < 8.0).astype(jnp.float32)
    m = edge * x[tgt] * mask
    if bf16_messages:
        # mirror the kernel's deliberate bf16 rounding of messages before the
        # (f32-accumulated) scatter.
        m = m.astype(jnp.bfloat16).astype(jnp.float32)
    aggr = jnp.zeros_like(x).at[src].add(m)
    return (x + aggr) @ wu + bu


if __name__ == "__main__":
    # Small deterministic problem: 8 nodes, 16 edges, 65 edge features,
    # in_channels=32, out_channels=16.
    N, E, F, CIN, COUT = 8, 16, 65, 32, 16
    key = jax.random.PRNGKey(0)
    k1, k2, k3, k4, k5, k6, k7, k8 = jax.random.split(key, 8)

    x = jax.random.normal(k1, (N, CIN), dtype=jnp.float32)
    edge_src = jax.random.randint(k2, (E,), 0, N, dtype=jnp.int32)
    edge_tgt = jax.random.randint(k3, (E,), 0, N, dtype=jnp.int32)
    edge_index = jnp.stack([edge_src, edge_tgt], axis=0)              # [2, E]
    # column 0 spans [0, 16) so the (< 8) mask hits both branches
    edge_attr = jax.random.uniform(k4, (E, F), dtype=jnp.float32) * 16.0

    # Parameters (PyTorch Linear stores W as [out, in]; we pass W^T = [in, out]).
    we = jax.random.normal(k5, (F, CIN), dtype=jnp.float32) * 0.1     # edgelinear weight^T
    be = jax.random.normal(k6, (CIN,), dtype=jnp.float32) * 0.1       # edgelinear bias
    wu = jax.random.normal(k7, (CIN, COUT), dtype=jnp.float32) * 0.1  # updatalinear weight^T
    bu = jax.random.normal(k8, (COUT,), dtype=jnp.float32) * 0.1      # updatalinear bias

    out = simple_graph_conv(x, edge_index, edge_attr, we, be, wu, bu)
    out = jax.block_until_ready(out)

    ref = reference(x, edge_index, edge_attr, we, be, wu, bu, bf16_messages=True)
    assert out.shape == (N, COUT)
    assert jnp.allclose(out, ref, atol=2e-2, rtol=2e-2), (
        "mismatch vs JAX reference, max abs diff %e" % float(jnp.max(jnp.abs(out - ref))))
    print("KERNEL_OK")
</pallas_src>

<mosaic_0001>
module attributes {stable_mosaic.version = 11 : i64} {
  func.func @message_kernel(%arg0: i32, %arg1: memref<72x128xf32, #tpu.memory_space<vmem>>, %arg2: memref<32x128xf32, #tpu.memory_space<vmem>>, %arg3: memref<32x72xf32, #tpu.memory_space<vmem>>, %arg4: memref<32x1xf32, #tpu.memory_space<vmem>>, %arg5: memref<32x128xbf16, #tpu.memory_space<vmem>>) attributes {dimension_semantics = [#tpu.dimension_semantics<parallel>], iteration_bounds = array<i64: 1>, scalar_prefetch = 0 : i64, scratch_operands = 0 : i64, tpu.core_type = #tpu.core_type<tc>, window_params = [{transform_indices = @transform_0, window_bounds = array<i64: 72, 128>}, {transform_indices = @transform_1, window_bounds = array<i64: 32, 128>}, {pipeline_mode = #tpu.pipeline_mode<synchronous>, transform_indices = @transform_2, window_bounds = array<i64: 32, 72>}, {pipeline_mode = #tpu.pipeline_mode<synchronous>, transform_indices = @transform_3, window_bounds = array<i64: 32, 1>}, {transform_indices = @transform_4, window_bounds = array<i64: 32, 128>}]} {
    %c0 = arith.constant 0 : index
    %c0_0 = arith.constant 0 : index
    %0 = vector.load %arg1[%c0, %c0_0] : memref<72x128xf32, #tpu.memory_space<vmem>>, vector<72x128xf32>
    %c0_1 = arith.constant 0 : index
    %c0_2 = arith.constant 0 : index
    %1 = vector.load %arg3[%c0_1, %c0_2] : memref<32x72xf32, #tpu.memory_space<vmem>>, vector<32x72xf32>
    %cst = arith.constant dense<0.000000e+00> : vector<32x128xf32>
    %2 = tpu.matmul %1, %0, %cst {dimension_numbers = #tpu.dot_dimension_numbers<[1], [0], [0], [1], [0, 0, 1, 1], [], []>} : vector<32x72xf32>, vector<72x128xf32>, vector<32x128xf32> -> vector<32x128xf32>
    %c0_3 = arith.constant 0 : index
    %c0_4 = arith.constant 0 : index
    %3 = vector.load %arg4[%c0_3, %c0_4] : memref<32x1xf32, #tpu.memory_space<vmem>>, vector<32x1xf32>
    %4 = vector.broadcast %3 : vector<32x1xf32> to vector<32x128xf32>
    %5 = arith.addf %2, %4 : vector<32x128xf32>
    %cst_5 = arith.constant 0.000000e+00 : f32
    %6 = vector.broadcast %cst_5 : f32 to vector<32x128xf32>
    %7 = arith.cmpf ogt, %5, %6 : vector<32x128xf32>
    %cst_6 = arith.constant 0.000000e+00 : f32
    %8 = vector.broadcast %cst_6 : f32 to vector<32x128xf32>
    %9 = arith.minimumf %5, %8 : vector<32x128xf32>
    %10 = math.exp %9 : vector<32x128xf32>
    %cst_7 = arith.constant 1.000000e+00 : f32
    %11 = vector.broadcast %cst_7 : f32 to vector<32x128xf32>
    %12 = arith.subf %10, %11 : vector<32x128xf32>
    %13 = arith.select %7, %5, %12 : vector<32x128xi1>, vector<32x128xf32>
    %14 = vector.extract_strided_slice %0 {offsets = [0, 0], sizes = [1, 128], strides = [1, 1]} : vector<72x128xf32> to vector<1x128xf32>
    %cst_8 = arith.constant 8.000000e+00 : f32
    %15 = vector.broadcast %cst_8 : f32 to vector<1x128xf32>
    %16 = arith.cmpf olt, %14, %15 : vector<1x128xf32>
    %17 = arith.extui %16 : vector<1x128xi1> to vector<1x128xi32>
    %18 = arith.sitofp %17 : vector<1x128xi32> to vector<1x128xf32>
    %c0_9 = arith.constant 0 : index
    %c0_10 = arith.constant 0 : index
    %19 = vector.load %arg2[%c0_9, %c0_10] : memref<32x128xf32, #tpu.memory_space<vmem>>, vector<32x128xf32>
    %20 = arith.mulf %13, %19 : vector<32x128xf32>
    %21 = vector.broadcast %18 : vector<1x128xf32> to vector<32x128xf32>
    %22 = arith.mulf %20, %21 : vector<32x128xf32>
    %23 = arith.truncf %22 : vector<32x128xf32> to vector<32x128xbf16>
    %c0_11 = arith.constant 0 : index
    %c0_12 = arith.constant 0 : index
    %24 = vector.load %arg5[%c0_11, %c0_12] : memref<32x128xbf16, #tpu.memory_space<vmem>>, vector<32x128xbf16>
    tpu.vector_store %arg5[%c0_11, %c0_12], %23 {strides = array<i32>} : memref<32x128xbf16, #tpu.memory_space<vmem>>, vector<32x128xbf16>,
    return
  }
  func.func @transform_0(%arg0: i32) -> (i32, i32) {
    %c0_i32 = arith.constant 0 : i32
    %c0_i32_0 = arith.constant 0 : i32
    return %c0_i32, %arg0 : i32, i32
  }
  func.func @transform_1(%arg0: i32) -> (i32, i32) {
    %c0_i32 = arith.constant 0 : i32
    %c0_i32_0 = arith.constant 0 : i32
    return %c0_i32, %arg0 : i32, i32
  }
  func.func @transform_2(%arg0: i32) -> (i32, i32) {
    %c0_i32 = arith.constant 0 : i32
    %c0_i32_0 = arith.constant 0 : i32
    %c0_i32_1 = arith.constant 0 : i32
    return %c0_i32, %c0_i32_0 : i32, i32
  }
  func.func @transform_3(%arg0: i32) -> (i32, i32) {
    %c0_i32 = arith.constant 0 : i32
    %c0_i32_0 = arith.constant 0 : i32
    %c0_i32_1 = arith.constant 0 : i32
    return %c0_i32, %c0_i32_0 : i32, i32
  }
  func.func @transform_4(%arg0: i32) -> (i32, i32) {
    %c0_i32 = arith.constant 0 : i32
    %c0_i32_0 = arith.constant 0 : i32
    return %c0_i32, %arg0 : i32, i32
  }
}

</mosaic_0001>

<llo_original>
// kernel: tpu_custom_call.1
$region0: #{tpu_custom_call.1}
  #allocation0 [shape = 'u32[]', space=smem, size = 0x4, offset = 0x4, fixed_abs, tag = 'smem constant byte address 0x4 - core index']
  #allocation1 [shape = 'u32[144,128]{1,0:T(1,128)}', space=vmem, size = 0x12000, scoped, tag = 'internal scratch']
  %s0 = inlined_call_operand.hbm [shape: f32[72,128], index: 0, kind: input, shape index: {}]
  %s1 = inlined_call_operand.vmem [shape: f32[32,128], index: 1, kind: input, shape index: {}]
  %s2 = inlined_call_operand.hbm [shape: f32[32,72], index: 2, kind: input, shape index: {}]
  %s3 = inlined_call_operand.vmem [shape: f32[32,1], index: 3, kind: input, shape index: {}]
  %s4 = inlined_call_operand.hbm [shape: bf16[32,128], index: 4, kind: output, shape index: {}]
  %s5 = sld [smem:[#allocation0]]
  $region34: #{tpu_custom_call.1} parent=0
    _
  %s7 = ssub.s32 1, %s5
  %s8 = scalar_select 0, %s7, %s5
  $region1: #{tpu_custom_call.1} parent=0
    #allocation2 [shape = 'u8[36864]{0}', space=vmem, size = 0x9000, scoped, tag = 'input window, operand 0, single buffered']
    #allocation3 [shape = 's32[1]{0}', space=sflag, size = 0x4, scoped, tag = 'scoped memory for tpu_custom_call.1']
    #allocation4 [shape = 's32[1]{0}', space=sflag, size = 0x4, scoped, tag = 'scoped memory for tpu_custom_call.1']
    #allocation5 [shape = 'u8[16384]{0}', space=vmem, size = 0x4000, scoped, tag = 'input window, operand 2, single buffered']
    #allocation6 [shape = 's32[1]{0}', space=sflag, size = 0x4, scoped, tag = 'scoped memory for tpu_custom_call.1']
    #allocation7 [shape = 'u8[8192]{0}', space=vmem, size = 0x2000, scoped, tag = 'output window, operand 0, single buffered']
    %9 = vsyncpa [#allocation3], 0
    %10 = vsyncpa [#allocation6], 0
    %11 = vsyncpa [#allocation4], 0
    // Predicated region
    $region2: #{tpu_custom_call.1} parent=1 // pred_check
      _
    $region3: #{tpu_custom_call.1} parent=1 // pred_check_branch
      %13 = sbr.rel (0) target = $region5
    $region4: #{tpu_custom_call.1} parent=1 // pred_region
      %s15 = ssub.s32 1152, 1152
      %16 = vsyncadd [#allocation3], %s15
      %s17 = sshll.u32 [#allocation2], 4
      %s18 = int_to_ptr.vmem [resolvable:$true] %s17
      %23 = dma.hbm_to_vmem [thread:$0]  %s0, 1152, %s18, [#allocation3], 128, 128, 8
    $region5: #{tpu_custom_call.1} parent=1 // pred_fallthru
      _
    // Predicated region
    $region6: #{tpu_custom_call.1} parent=1 // pred_check
      _
    $region7: #{tpu_custom_call.1} parent=1 // pred_check_branch
      %25 = sbr.rel (0) target = $region9
    $region8: #{tpu_custom_call.1} parent=1 // pred_region
      _
    $region9: #{tpu_custom_call.1} parent=1 // pred_fallthru
      _
    // Predicated region
    $region10: #{tpu_custom_call.1} parent=1 // pred_check
      _
    $region11: #{tpu_custom_call.1} parent=1 // pred_check_branch
      %27 = sbr.rel (0) target = $region13
    $region12: #{tpu_custom_call.1} parent=1 // pred_region
      %s29 = ssub.s32 512, 512
      %30 = vsyncadd [#allocation6], %s29
      %s31 = sshll.u32 [#allocation5], 4
      %s32 = int_to_ptr.vmem [resolvable:$true] %s31
      %37 = dma.hbm_to_vmem [thread:$0]  %s2, 512, %s32, [#allocation6], 128, 128, 8
    $region13: #{tpu_custom_call.1} parent=1 // pred_fallthru
      _
    // Predicated region
    $region14: #{tpu_custom_call.1} parent=1 // pred_check
      _
    $region15: #{tpu_custom_call.1} parent=1 // pred_check_branch
      %39 = sbr.rel (0) target = $region17
    $region16: #{tpu_custom_call.1} parent=1 // pred_region
      _
    $region17: #{tpu_custom_call.1} parent=1 // pred_fallthru
      _
    // Predicated region
    $region18: #{tpu_custom_call.1} parent=1 // pred_check
      _
    $region19: #{tpu_custom_call.1} parent=1 // pred_check_branch
      %41 = sbr.rel (0) target = $region21
    $region20: #{tpu_custom_call.1} parent=1 // pred_region
      %42 = dma.done [#allocation3], 1152
    $region21: #{tpu_custom_call.1} parent=1 // pred_fallthru
      _
    // Predicated region
    $region22: #{tpu_custom_call.1} parent=1 // pred_check
      _
    $region23: #{tpu_custom_call.1} parent=1 // pred_check_branch
      %44 = sbr.rel (0) target = $region25
    $region24: #{tpu_custom_call.1} parent=1 // pred_region
      %45 = dma.done [#allocation6], 512
    $region25: #{tpu_custom_call.1} parent=1 // pred_fallthru
      _
    %v46 = vld [vmem:[#allocation2] sm:$0xff]
    %v47 = vld [vmem:[#allocation2 + $0x8] sm:$0xff]
    %v48 = vld [vmem:[#allocation2 + $0x10] sm:$0xff]
    %v49 = vld [vmem:[#allocation2 + $0x18] sm:$0xff]
    %v50 = vld [vmem:[#allocation2 + $0x20] sm:$0xff]
    %v51 = vld [vmem:[#allocation2 + $0x28] sm:$0xff]
    %v52 = vld [vmem:[#allocation2 + $0x30] sm:$0xff]
    %v53 = vld [vmem:[#allocation2 + $0x38] sm:$0xff]
    %v54 = vld [vmem:[#allocation2 + $0x40] sm:$0xff]
    %v55 = vld [vmem:[#allocation5] sm:$0xff]
    %v56 = vld [vmem:[#allocation5 + $0x8] sm:$0xff]
    %v57 = vld [vmem:[#allocation5 + $0x10] sm:$0xff]
    %v58 = vld [vmem:[#allocation5 + $0x18] sm:$0xff]
    %v59 = vld [vmem:[%s3] sm:$0xff]
    %v60 = vld [vmem:[%s3 + $0x8] sm:$0xff]
    %v61 = vld [vmem:[%s3 + $0x10] sm:$0xff]
    %v62 = vld [vmem:[%s3 + $0x18] sm:$0xff]
    %64 = vset.pattern.permute.xlu0 0
    %65 = vperm.xlu0 %64, %v59
    %v66 = vpop.permute.xlu0 %65
    %69 = vset.pattern.permute.xlu0 0
    %70 = vperm.xlu0 %69, %v60
    %v71 = vpop.permute.xlu0 %70
    %74 = vset.pattern.permute.xlu0 0
    %75 = vperm.xlu0 %74, %v61
    %v76 = vpop.permute.xlu0 %75
    %79 = vset.pattern.permute.xlu0 0
    %80 = vperm.xlu0 %79, %v62
    %v81 = vpop.permute.xlu0 %80
    %vm83 = vcmask 588800
    %v85 = vsel %vm83, %v55, 0
    %v88 = vsel %vm83, %v56, 0
    %v91 = vsel %vm83, %v57, 0
    %v94 = vsel %vm83, %v58, 0
    %96 = vmatprep.subr.mxu0 0.0
    %97 = vmatpush1.msra.mxu0 0.0
    %98 = vmatprep.subr.mxu0 0.0
    %99 = vmatpush1.msra.mxu0 0.0
    %100 = vmatprep.subr.mxu0 0.0
    %101 = vmatpush1.msra.mxu0 0.0
    %102 = vmatprep.subr.mxu0 0.0
    %103 = vmatpush1.msra.mxu0 0.0
    %104 = vmatprep.subr.mxu0 0.0
    %105 = vmatpush1.msra.mxu0 0.0
    %106 = vmatprep.subr.mxu0 0.0
    %107 = vmatpush1.msra.mxu0 0.0
    %108 = vmatprep.subr.mxu0 0.0
    %109 = vmatpush1.msra.mxu0 0.0
    %110 = vmatprep.subr.mxu0 0.0
    %111 = vmatpush1.msra.mxu0 %v54
    %112 = vmatprep.subr.mxu0 0.0
    %113 = vmatpush1.msra.mxu0 %v53
    %114 = vmatprep.subr.mxu0 0.0
    %115 = vmatpush1.msra.mxu0 %v52
    %116 = vmatprep.subr.mxu0 0.0
    %117 = vmatpush1.msra.mxu0 %v51
    %118 = vmatprep.subr.mxu0 0.0
    %119 = vmatpush1.msra.mxu0 %v50
    %120 = vmatprep.subr.mxu0 0.0
    %121 = vmatpush1.msra.mxu0 %v49
    %122 = vmatprep.subr.mxu0 0.0
    %123 = vmatpush1.msra.mxu0 %v48
    %124 = vmatprep.subr.mxu0 0.0
    %125 = vmatpush1.msra.mxu0 %v47
    %126 = vmatprep.subr.mxu0 0.0
    %127 = vmatpush1.msra.mxu0 %v46
    %128 = vmatprep.subr.mxu0 0.0
    %129 = vmatpush2.msra.mxu0 0.0
    %130 = vmatprep.subr.mxu0 0.0
    %131 = vmatpush2.msra.mxu0 0.0
    %132 = vmatprep.subr.mxu0 0.0
    %133 = vmatpush2.msra.mxu0 0.0
    %134 = vmatprep.subr.mxu0 0.0
    %135 = vmatpush2.msra.mxu0 0.0
    %136 = vmatprep.subr.mxu0 0.0
    %137 = vmatpush2.msra.mxu0 0.0
    %138 = vmatprep.subr.mxu0 0.0
    %139 = vmatpush2.msra.mxu0 0.0
    %140 = vmatprep.subr.mxu0 0.0
    %141 = vmatpush2.msra.mxu0 0.0
    %142 = vmatprep.subr.mxu0 0.0
    %143 = vmatpush2.msra.mxu0 0.0
    %144 = vmatprep.subr.mxu0 0.0
    %145 = vmatpush2.msra.mxu0 0.0
    %146 = vmatprep.subr.mxu0 0.0
    %147 = vmatpush2.msra.mxu0 0.0
    %148 = vmatprep.subr.mxu0 0.0
    %149 = vmatpush2.msra.mxu0 0.0
    %150 = vmatprep.subr.mxu0 0.0
    %151 = vmatpush2.msra.mxu0 0.0
    %152 = vmatprep.subr.mxu0 0.0
    %153 = vmatpush2.msra.mxu0 0.0
    %154 = vmatprep.subr.mxu0 0.0
    %155 = vmatpush2.msra.mxu0 0.0
    %156 = vmatprep.subr.mxu0 0.0
    %157 = vmatpush2.msra.mxu0 0.0
    %158 = vmatprep.subr.mxu0 0.0
    %159 = vmatpush2.msra.mxu0 0.0
    %160 = vmatprep.mubr.f32.mxu0 0.0
    %161 = vmatmul.mubr.f32.gmra.mxu0 %v85
    %v162 = vpop.f32.mrf.mxu0
    %v163 = vadd.f32 %v66, %v162
    %v164 = vpop.f32.mrf.mxu0
    %165 = vmatprep.mubr.f32.mxu0 0.0
    %166 = vmatmul.mubr.f32.gmra.mxu0 %v88
    %v167 = vpop.f32.mrf.mxu0
    %v168 = vadd.f32 %v71, %v167
    %v169 = vpop.f32.mrf.mxu0
    %170 = vmatprep.mubr.f32.mxu0 0.0
    %171 = vmatmul.mubr.f32.gmra.mxu0 %v91
    %v172 = vpop.f32.mrf.mxu0
    %v173 = vadd.f32 %v76, %v172
    %v174 = vpop.f32.mrf.mxu0
    %175 = vmatprep.mubr.f32.mxu0 0.0
    %176 = vmatmul.mubr.f32.gmra.mxu0 %v94
    %v177 = vpop.f32.mrf.mxu0
    %v178 = vadd.f32 %v81, %v177
    %v179 = vpop.f32.mrf.mxu0
    %180 = vdwg.mxu0
    %vm181 = vcmp.gt.f32.partialorder %v163, 0.0
    %vm182 = vcmp.gt.f32.partialorder %v168, 0.0
    %vm183 = vcmp.gt.f32.partialorder %v173, 0.0
    %vm184 = vcmp.gt.f32.partialorder %v178, 0.0
    %v185 = vmin.f32 %v163, 0.0
    %v186 = vmin.f32 %v168, 0.0
    %v187 = vmin.f32 %v173, 0.0
    %v188 = vmin.f32 %v178, 0.0
    %v189 = vmul.f32 %v185, 1.442695
    %v190 = vpow.pop %v189
    %v191 = vmul.f32 %v186, 1.442695
    %v192 = vpow.pop %v191
    %v193 = vmul.f32 %v187, 1.442695
    %v194 = vpow.pop %v193
    %v195 = vmul.f32 %v188, 1.442695
    %v196 = vpow.pop %v195
    %v197 = vsub.f32 %v190, 1.0
    %v198 = vsub.f32 %v192, 1.0
    %v199 = vsub.f32 %v194, 1.0
    %v200 = vsub.f32 %v196, 1.0
    %v201 = vsel %vm181, %v163, %v197
    %v202 = vsel %vm182, %v168, %v198
    %v203 = vsel %vm183, %v173, %v199
    %v204 = vsel %vm184, %v178, %v200
    %vm205 = vcmp.lt.f32.partialorder %v46, 8.0
    %v206 = vsel %vm205, 1, 0
    %v207 = vcvt.s32.f32 %v206
    %v208 = vld [vmem:[%s1] sm:$0xff]
    %v209 = vld [vmem:[%s1 + $0x8] sm:$0xff]
    %v210 = vld [vmem:[%s1 + $0x10] sm:$0xff]
    %v211 = vld [vmem:[%s1 + $0x18] sm:$0xff]
    %v212 = vmul.f32 %v201, %v208
    %v213 = vmul.f32 %v202, %v209
    %v214 = vmul.f32 %v203, %v210
    %v215 = vmul.f32 %v204, %v211
    %v216 = vlaneseq
    %v217 = vshrl.u32 %v216, 7
    %v218 = vsub.s32 0, %v217
    %v219 = vrot.slane %v207, %v218
    %v220 = vmul.f32 %v212, %v219
    %v221 = vmul.f32 %v213, %v219
    %v222 = vmul.f32 %v214, %v219
    %v223 = vmul.f32 %v215, %v219
    %v224 = vpack.c.bf16 %v221, %v220
    %v225 = vpack.c.bf16 %v223, %v222
    %v228 = vunpack.c.l.b16 %v224
    %v229 = vunpack.c.h.b16 %v224
    %v230 = vunpack.c.l.b16 %v225
    %v231 = vunpack.c.h.b16 %v225
    %v232 = vpack.c.b16 %v228, %v228
    %v233 = vpack.c.b16 %v229, %v229
    %v234 = vpack.c.b16 %v230, %v230
    %v235 = vpack.c.b16 %v231, %v231
    %240 = vst [vmem:[#allocation7] sm:$0xf] %v232
    %241 = vst [vmem:[#allocation7 + $0x4] sm:$0xf] %v233
    %242 = vst [vmem:[#allocation7 + $0x8] sm:$0xf] %v234
    %243 = vst [vmem:[#allocation7 + $0xc] sm:$0xf] %v235
    // Predicated region
    $region26: #{tpu_custom_call.1} parent=1 // pred_check
      _
    $region27: #{tpu_custom_call.1} parent=1 // pred_check_branch
      %245 = sbr.rel (0) target = $region29
    $region28: #{tpu_custom_call.1} parent=1 // pred_region
      %s247 = ssub.s32 256, 256
      %248 = vsyncadd [#allocation4], %s247
      %s249 = sshll.u32 [#allocation7], 4
      %s250 = int_to_ptr.vmem [resolvable:$true] %s249
      %255 = dma.vmem_to_hbm [thread:$0]  %s250, 256, %s4, [#allocation4], 64, 64, 4
    $region29: #{tpu_custom_call.1} parent=1 // pred_fallthru
      _
    // Predicated region
    $region30: #{tpu_custom_call.1} parent=1 // pred_check
      _
    $region31: #{tpu_custom_call.1} parent=1 // pred_check_branch
      %257 = sbr.rel (0) target = $region33
    $region32: #{tpu_custom_call.1} parent=1 // pred_region
      %258 = dma.done [#allocation4], 256
    $region33: #{tpu_custom_call.1} parent=1 // pred_fallthru
      _
    %259 = vsyncpa [#allocation3], 1
    %260 = vsyncpa [#allocation6], 1
    %261 = vsyncpa [#allocation4], 1

</llo_original>
